<compile_context>
chip_gen: v5e
topology: v5e:2x2
jax: 0.10.0
libtpu: 0.0.40
codegen_flags: <defaults>
</compile_context>

<pallas_src>
import functools

import jax
import jax.numpy as jnp
from jax import lax
from jax.experimental import pallas as pl
from jax.experimental.pallas import tpu as pltpu


def _double_conv_kernel(x_ref, w1_ref, sh1_ref, w2_ref, sh2_ref, o_ref,
                        xpad_ref, mid_ref, *, H, W, Cin, Cmid):
    """Fused (conv3x3 + BN + ReLU) x 2 for one batch element, lane-dense.

    x_ref:   (1, H, W*Cin)            bf16 lane-dense input
    w1_ref:  (3, Wp*Cin,  W*Cmid)     bf16 banded weights, BN1 scale folded in
    sh1_ref: (1, W*Cmid)              f32 folded BN1 shift (incl. conv bias)
    w2_ref:  (3, Wp*Cmid, W*Cout)     bf16 banded weights, BN2 scale folded in
    sh2_ref: (1, W*Cout)              f32 folded BN2 shift (incl. conv bias)
    o_ref:   (1, H, W*Cout)           bf16 lane-dense output
    xpad_ref:(H+2, Wp*Cin)            bf16 VMEM scratch, zero halo + interior
    mid_ref: (H+2, Wp*Cmid)           bf16 VMEM scratch for the stage-1 act
    """
    def conv(src_ref, w_ref, sh_ref):
        # One matmul per kernel row dy; K carries (padded column, channel),
        # N carries (output column, channel).  Zero entries of the banded
        # weight waste MXU flops (idle anyway at these sizes) but keep every
        # VPU / store op fully lane-dense.
        acc = jnp.dot(src_ref[0:H, :], w_ref[0],
                      preferred_element_type=jnp.float32)
        acc = acc + jnp.dot(src_ref[1:H + 1, :], w_ref[1],
                            preferred_element_type=jnp.float32)
        acc = acc + jnp.dot(src_ref[2:H + 2, :], w_ref[2],
                            preferred_element_type=jnp.float32)
        return jnp.maximum(acc + sh_ref[...], 0.0)   # fused BN shift + ReLU

    # ---- stage the input with its zero halo in VMEM -------------------------
    # Re-zeroed every step (megacore-safe; ~2 vregs), interior overwritten.
    xpad_ref[...] = jnp.zeros_like(xpad_ref)
    xpad_ref[1:H + 1, Cin:(W + 1) * Cin] = x_ref[0]

    # ---- conv1 + BN1 + ReLU -------------------------------------------------
    y1 = conv(xpad_ref, w1_ref, sh1_ref)             # (H, W*Cmid) f32

    # ---- stage-1 activation stays in VMEM with its zero halo ----------------
    mid_ref[...] = jnp.zeros_like(mid_ref)
    mid_ref[1:H + 1, Cmid:(W + 1) * Cmid] = y1.astype(mid_ref.dtype)

    # ---- conv2 + BN2 + ReLU -------------------------------------------------
    y2 = conv(mid_ref, w2_ref, sh2_ref)               # (H, W*Cout) f32

    # Lane-dense bf16 store (128 lanes for W=16, Cout=8).
    o_ref[0] = y2.astype(o_ref.dtype)


def _fold_bn_banded(w_oihw, bias, gamma, beta, rmean, rvar, W, eps=1e-5):
    """Fold conv bias + eval-mode BN into banded lane-dense weights + shift.

    Returns:
      big:   (3, (W+2)*Cin, W*Cout) bf16 with
             big[dy, (j+dx)*Cin + ci, j*Cout + co] = w[co, ci, dy, dx] * scale[co]
      shift: (1, W*Cout) f32 = ((bias - mean) * scale + beta) tiled across W
    """
    out_ch, in_ch = w_oihw.shape[0], w_oihw.shape[1]
    Wp = W + 2
    s = gamma / jnp.sqrt(rvar + eps)                           # per out-channel
    w = jnp.transpose(w_oihw, (2, 3, 1, 0)) * s                # (3,3,Cin,Cout) scaled
    w3 = w.reshape(3, 3 * in_ch, out_ch).astype(jnp.bfloat16)  # (dy, dx*Cin+ci, co)
    big = jnp.zeros((3, Wp * in_ch, W * out_ch), jnp.bfloat16)
    for j in range(W):                                         # block-banded placement
        big = big.at[:, j * in_ch:(j + 3) * in_ch,
                     j * out_ch:(j + 1) * out_ch].set(w3)
    shift = ((bias - rmean) * s + beta).astype(jnp.float32)
    shift = jnp.tile(shift, (W,)).reshape(1, W * out_ch)
    return big, shift


def double_conv_pallas(x_nchw, params, eps=1e-5):
    """PyTorch-semantics forward: NCHW f32 in -> NCHW f32 out (BN eval mode)."""
    B, Cin, H, W = x_nchw.shape
    Cmid = params["w1"].shape[0]
    Cout = params["w2"].shape[0]
    Wp = W + 2

    # NCHW -> lane-dense (B, H, W*Cin) bf16 (single tiny HBM pass, half DMA bytes).
    x = jnp.transpose(x_nchw, (0, 2, 3, 1)).astype(jnp.bfloat16)
    x = x.reshape(B, H, W * Cin)

    w1, sh1 = _fold_bn_banded(params["w1"], params["b1"], params["g1"],
                              params["be1"], params["rm1"], params["rv1"], W, eps)
    w2, sh2 = _fold_bn_banded(params["w2"], params["b2"], params["g2"],
                              params["be2"], params["rm2"], params["rv2"], W, eps)

    kernel = functools.partial(_double_conv_kernel, H=H, W=W, Cin=Cin, Cmid=Cmid)

    out = pl.pallas_call(
        kernel,
        out_shape=jax.ShapeDtypeStruct((B, H, W * Cout), jnp.bfloat16),
        grid_spec=pltpu.PrefetchScalarGridSpec(
            num_scalar_prefetch=0,
            grid=(B,),
            in_specs=[
                pl.BlockSpec((1, H, W * Cin), lambda b: (b, 0, 0)),
                pl.BlockSpec((3, Wp * Cin, W * Cmid), lambda b: (0, 0, 0)),
                pl.BlockSpec((1, W * Cmid), lambda b: (0, 0)),
                pl.BlockSpec((3, Wp * Cmid, W * Cout), lambda b: (0, 0, 0)),
                pl.BlockSpec((1, W * Cout), lambda b: (0, 0)),
            ],
            out_specs=pl.BlockSpec((1, H, W * Cout), lambda b: (b, 0, 0)),
            scratch_shapes=[
                pltpu.VMEM((H + 2, Wp * Cin), jnp.bfloat16),    # padded input
                pltpu.VMEM((H + 2, Wp * Cmid), jnp.bfloat16),   # padded stage-1
            ],
        ),
        compiler_params=pltpu.CompilerParams(
            dimension_semantics=("parallel",)),
    )(x, w1, sh1, w2, sh2)

    # bf16 NHWC -> f32 NCHW only to match the PyTorch module's output contract.
    out = out.reshape(B, H, W, Cout)
    return jnp.transpose(out, (0, 3, 1, 2)).astype(jnp.float32)


def _reference(x_nchw, params, eps=1e-5):
    """Pure-JAX f32 reference (lax conv) for validation."""
    def block(x, w, b, g, be, rm, rv):
        y = lax.conv_general_dilated(
            x, w, window_strides=(1, 1), padding="SAME",
            dimension_numbers=("NCHW", "OIHW", "NCHW"))
        y = y + b[None, :, None, None]
        y = (y - rm[None, :, None, None]) / jnp.sqrt(rv[None, :, None, None] + eps)
        y = y * g[None, :, None, None] + be[None, :, None, None]
        return jnp.maximum(y, 0.0)

    x = block(x_nchw, params["w1"], params["b1"], params["g1"], params["be1"],
              params["rm1"], params["rv1"])
    x = block(x, params["w2"], params["b2"], params["g2"], params["be2"],
              params["rm2"], params["rv2"])
    return x


if __name__ == "__main__":
    key = jax.random.PRNGKey(0)
    B, Cin, Cout, H, W = 2, 4, 8, 16, 16

    keys = jax.random.split(key, 12)
    params = {
        # conv1: (out_ch, in_ch, 3, 3) + bias
        "w1": jax.random.normal(keys[0], (Cout, Cin, 3, 3), jnp.float32) * 0.1,
        "b1": jax.random.normal(keys[1], (Cout,), jnp.float32) * 0.1,
        # bn1 (eval mode): gamma, beta, running_mean, running_var
        "g1": 1.0 + 0.1 * jax.random.normal(keys[2], (Cout,), jnp.float32),
        "be1": 0.1 * jax.random.normal(keys[3], (Cout,), jnp.float32),
        "rm1": 0.1 * jax.random.normal(keys[4], (Cout,), jnp.float32),
        "rv1": 1.0 + 0.1 * jnp.abs(jax.random.normal(keys[5], (Cout,), jnp.float32)),
        # conv2: (out_ch, out_ch, 3, 3) + bias
        "w2": jax.random.normal(keys[6], (Cout, Cout, 3, 3), jnp.float32) * 0.1,
        "b2": jax.random.normal(keys[7], (Cout,), jnp.float32) * 0.1,
        # bn2
        "g2": 1.0 + 0.1 * jax.random.normal(keys[8], (Cout,), jnp.float32),
        "be2": 0.1 * jax.random.normal(keys[9], (Cout,), jnp.float32),
        "rm2": 0.1 * jax.random.normal(keys[10], (Cout,), jnp.float32),
        "rv2": 1.0 + 0.1 * jnp.abs(jax.random.normal(keys[11], (Cout,), jnp.float32)),
    }

    x = jax.random.normal(jax.random.PRNGKey(42), (B, Cin, H, W), jnp.float32)

    out = jax.block_until_ready(double_conv_pallas(x, params))
    ref = jax.block_until_ready(_reference(x, params))

    assert out.shape == (B, Cout, H, W), out.shape
    # bf16 matmul operands + bf16 intermediate + bf16 output vs f32 reference.
    assert jnp.allclose(out, ref, atol=4e-2, rtol=4e-2), \
        float(jnp.max(jnp.abs(out - ref)))
    print("KERNEL_OK")
</pallas_src>

<mosaic_0001>
module attributes {stable_mosaic.version = 11 : i64} {
  func.func @_double_conv_kernel(%arg0: i32, %arg1: memref<1x16x64xbf16, #tpu.memory_space<vmem>>, %arg2: memref<3x72x128xbf16, #tpu.memory_space<vmem>>, %arg3: memref<1x128xf32, #tpu.memory_space<vmem>>, %arg4: memref<3x144x128xbf16, #tpu.memory_space<vmem>>, %arg5: memref<1x128xf32, #tpu.memory_space<vmem>>, %arg6: memref<1x16x128xbf16, #tpu.memory_space<vmem>>, %arg7: memref<18x72xbf16, #tpu.memory_space<vmem>>, %arg8: memref<18x144xbf16, #tpu.memory_space<vmem>>) attributes {dimension_semantics = [#tpu.dimension_semantics<parallel>], iteration_bounds = array<i64: 2>, scalar_prefetch = 0 : i64, scratch_operands = 2 : i64, tpu.core_type = #tpu.core_type<tc>, window_params = [{transform_indices = @transform_0, window_bounds = array<i64: 1, 16, 64>}, {pipeline_mode = #tpu.pipeline_mode<synchronous>, transform_indices = @transform_1, window_bounds = array<i64: 3, 72, 128>}, {pipeline_mode = #tpu.pipeline_mode<synchronous>, transform_indices = @transform_2, window_bounds = array<i64: 1, 128>}, {pipeline_mode = #tpu.pipeline_mode<synchronous>, transform_indices = @transform_3, window_bounds = array<i64: 3, 144, 128>}, {pipeline_mode = #tpu.pipeline_mode<synchronous>, transform_indices = @transform_4, window_bounds = array<i64: 1, 128>}, {transform_indices = @transform_5, window_bounds = array<i64: 1, 16, 128>}]} {
    %cst = arith.constant 0.000000e+00 : bf16
    %0 = vector.broadcast %cst : bf16 to vector<18x72xbf16>
    %c0 = arith.constant 0 : index
    %c0_0 = arith.constant 0 : index
    %1 = vector.load %arg7[%c0, %c0_0] : memref<18x72xbf16, #tpu.memory_space<vmem>>, vector<18x72xbf16>
    tpu.vector_store %arg7[%c0, %c0_0], %0 {strides = array<i32>} : memref<18x72xbf16, #tpu.memory_space<vmem>>, vector<18x72xbf16>,
    %c0_1 = arith.constant 0 : index
    %c0_2 = arith.constant 0 : index
    %c0_3 = arith.constant 0 : index
    %2 = vector.load %arg1[%c0_1, %c0_2, %c0_3] : memref<1x16x64xbf16, #tpu.memory_space<vmem>>, vector<1x16x64xbf16>
    %3 = vector.shape_cast %2 : vector<1x16x64xbf16> to vector<16x64xbf16>
    %c1 = arith.constant 1 : index
    %c4 = arith.constant 4 : index
    %4 = vector.load %arg7[%c1, %c4] : memref<18x72xbf16, #tpu.memory_space<vmem>>, vector<16x64xbf16>
    tpu.vector_store %arg7[%c1, %c4], %3 {strides = array<i32>} : memref<18x72xbf16, #tpu.memory_space<vmem>>, vector<16x64xbf16>,
    %c0_4 = arith.constant 0 : index
    %c0_5 = arith.constant 0 : index
    %5 = vector.load %arg7[%c0_4, %c0_5] : memref<18x72xbf16, #tpu.memory_space<vmem>>, vector<16x72xbf16>
    %c0_6 = arith.constant 0 : index
    %c0_7 = arith.constant 0 : index
    %c0_8 = arith.constant 0 : index
    %6 = vector.load %arg2[%c0_6, %c0_7, %c0_8] : memref<3x72x128xbf16, #tpu.memory_space<vmem>>, vector<1x72x128xbf16>
    %7 = vector.shape_cast %6 : vector<1x72x128xbf16> to vector<72x128xbf16>
    %cst_9 = arith.constant dense<0.000000e+00> : vector<16x128xf32>
    %8 = tpu.matmul %5, %7, %cst_9 {dimension_numbers = #tpu.dot_dimension_numbers<[1], [0], [0], [1], [0, 0, 1, 1], [], []>} : vector<16x72xbf16>, vector<72x128xbf16>, vector<16x128xf32> -> vector<16x128xf32>
    %c1_10 = arith.constant 1 : index
    %c0_11 = arith.constant 0 : index
    %9 = vector.load %arg7[%c1_10, %c0_11] : memref<18x72xbf16, #tpu.memory_space<vmem>>, vector<16x72xbf16>
    %c1_12 = arith.constant 1 : index
    %c0_13 = arith.constant 0 : index
    %c0_14 = arith.constant 0 : index
    %10 = vector.load %arg2[%c1_12, %c0_13, %c0_14] : memref<3x72x128xbf16, #tpu.memory_space<vmem>>, vector<1x72x128xbf16>
    %11 = vector.shape_cast %10 : vector<1x72x128xbf16> to vector<72x128xbf16>
    %cst_15 = arith.constant dense<0.000000e+00> : vector<16x128xf32>
    %12 = tpu.matmul %9, %11, %cst_15 {dimension_numbers = #tpu.dot_dimension_numbers<[1], [0], [0], [1], [0, 0, 1, 1], [], []>} : vector<16x72xbf16>, vector<72x128xbf16>, vector<16x128xf32> -> vector<16x128xf32>
    %13 = arith.addf %8, %12 : vector<16x128xf32>
    %c2 = arith.constant 2 : index
    %c0_16 = arith.constant 0 : index
    %14 = vector.load %arg7[%c2, %c0_16] : memref<18x72xbf16, #tpu.memory_space<vmem>>, vector<16x72xbf16>
    %c2_17 = arith.constant 2 : index
    %c0_18 = arith.constant 0 : index
    %c0_19 = arith.constant 0 : index
    %15 = vector.load %arg2[%c2_17, %c0_18, %c0_19] : memref<3x72x128xbf16, #tpu.memory_space<vmem>>, vector<1x72x128xbf16>
    %16 = vector.shape_cast %15 : vector<1x72x128xbf16> to vector<72x128xbf16>
    %cst_20 = arith.constant dense<0.000000e+00> : vector<16x128xf32>
    %17 = tpu.matmul %14, %16, %cst_20 {dimension_numbers = #tpu.dot_dimension_numbers<[1], [0], [0], [1], [0, 0, 1, 1], [], []>} : vector<16x72xbf16>, vector<72x128xbf16>, vector<16x128xf32> -> vector<16x128xf32>
    %18 = arith.addf %13, %17 : vector<16x128xf32>
    %c0_21 = arith.constant 0 : index
    %c0_22 = arith.constant 0 : index
    %19 = vector.load %arg3[%c0_21, %c0_22] : memref<1x128xf32, #tpu.memory_space<vmem>>, vector<1x128xf32>
    %20 = vector.broadcast %19 : vector<1x128xf32> to vector<16x128xf32>
    %21 = arith.addf %18, %20 : vector<16x128xf32>
    %cst_23 = arith.constant 0.000000e+00 : f32
    %22 = vector.broadcast %cst_23 : f32 to vector<16x128xf32>
    %23 = arith.maximumf %21, %22 : vector<16x128xf32>
    %cst_24 = arith.constant 0.000000e+00 : bf16
    %24 = vector.broadcast %cst_24 : bf16 to vector<18x144xbf16>
    %c0_25 = arith.constant 0 : index
    %c0_26 = arith.constant 0 : index
    %25 = vector.load %arg8[%c0_25, %c0_26] : memref<18x144xbf16, #tpu.memory_space<vmem>>, vector<18x144xbf16>
    tpu.vector_store %arg8[%c0_25, %c0_26], %24 {strides = array<i32>} : memref<18x144xbf16, #tpu.memory_space<vmem>>, vector<18x144xbf16>,
    %26 = arith.truncf %23 : vector<16x128xf32> to vector<16x128xbf16>
    %c1_27 = arith.constant 1 : index
    %c8 = arith.constant 8 : index
    %27 = vector.load %arg8[%c1_27, %c8] : memref<18x144xbf16, #tpu.memory_space<vmem>>, vector<16x128xbf16>
    tpu.vector_store %arg8[%c1_27, %c8], %26 {strides = array<i32>} : memref<18x144xbf16, #tpu.memory_space<vmem>>, vector<16x128xbf16>,
    %c0_28 = arith.constant 0 : index
    %c0_29 = arith.constant 0 : index
    %28 = vector.load %arg8[%c0_28, %c0_29] : memref<18x144xbf16, #tpu.memory_space<vmem>>, vector<16x144xbf16>
    %c0_30 = arith.constant 0 : index
    %c0_31 = arith.constant 0 : index
    %c0_32 = arith.constant 0 : index
    %29 = vector.load %arg4[%c0_30, %c0_31, %c0_32] : memref<3x144x128xbf16, #tpu.memory_space<vmem>>, vector<1x144x128xbf16>
    %30 = vector.shape_cast %29 : vector<1x144x128xbf16> to vector<144x128xbf16>
    %cst_33 = arith.constant dense<0.000000e+00> : vector<16x128xf32>
    %31 = tpu.matmul %28, %30, %cst_33 {dimension_numbers = #tpu.dot_dimension_numbers<[1], [0], [0], [1], [0, 0, 1, 1], [], []>} : vector<16x144xbf16>, vector<144x128xbf16>, vector<16x128xf32> -> vector<16x128xf32>
    %c1_34 = arith.constant 1 : index
    %c0_35 = arith.constant 0 : index
    %32 = vector.load %arg8[%c1_34, %c0_35] : memref<18x144xbf16, #tpu.memory_space<vmem>>, vector<16x144xbf16>
    %c1_36 = arith.constant 1 : index
    %c0_37 = arith.constant 0 : index
    %c0_38 = arith.constant 0 : index
    %33 = vector.load %arg4[%c1_36, %c0_37, %c0_38] : memref<3x144x128xbf16, #tpu.memory_space<vmem>>, vector<1x144x128xbf16>
    %34 = vector.shape_cast %33 : vector<1x144x128xbf16> to vector<144x128xbf16>
    %cst_39 = arith.constant dense<0.000000e+00> : vector<16x128xf32>
    %35 = tpu.matmul %32, %34, %cst_39 {dimension_numbers = #tpu.dot_dimension_numbers<[1], [0], [0], [1], [0, 0, 1, 1], [], []>} : vector<16x144xbf16>, vector<144x128xbf16>, vector<16x128xf32> -> vector<16x128xf32>
    %36 = arith.addf %31, %35 : vector<16x128xf32>
    %c2_40 = arith.constant 2 : index
    %c0_41 = arith.constant 0 : index
    %37 = vector.load %arg8[%c2_40, %c0_41] : memref<18x144xbf16, #tpu.memory_space<vmem>>, vector<16x144xbf16>
    %c2_42 = arith.constant 2 : index
    %c0_43 = arith.constant 0 : index
    %c0_44 = arith.constant 0 : index
    %38 = vector.load %arg4[%c2_42, %c0_43, %c0_44] : memref<3x144x128xbf16, #tpu.memory_space<vmem>>, vector<1x144x128xbf16>
    %39 = vector.shape_cast %38 : vector<1x144x128xbf16> to vector<144x128xbf16>
    %cst_45 = arith.constant dense<0.000000e+00> : vector<16x128xf32>
    %40 = tpu.matmul %37, %39, %cst_45 {dimension_numbers = #tpu.dot_dimension_numbers<[1], [0], [0], [1], [0, 0, 1, 1], [], []>} : vector<16x144xbf16>, vector<144x128xbf16>, vector<16x128xf32> -> vector<16x128xf32>
    %41 = arith.addf %36, %40 : vector<16x128xf32>
    %c0_46 = arith.constant 0 : index
    %c0_47 = arith.constant 0 : index
    %42 = vector.load %arg5[%c0_46, %c0_47] : memref<1x128xf32, #tpu.memory_space<vmem>>, vector<1x128xf32>
    %43 = vector.broadcast %42 : vector<1x128xf32> to vector<16x128xf32>
    %44 = arith.addf %41, %43 : vector<16x128xf32>
    %cst_48 = arith.constant 0.000000e+00 : f32
    %45 = vector.broadcast %cst_48 : f32 to vector<16x128xf32>
    %46 = arith.maximumf %44, %45 : vector<16x128xf32>
    %47 = arith.truncf %46 : vector<16x128xf32> to vector<16x128xbf16>
    %c0_49 = arith.constant 0 : index
    %c0_50 = arith.constant 0 : index
    %c0_51 = arith.constant 0 : index
    %48 = vector.load %arg6[%c0_49, %c0_50, %c0_51] : memref<1x16x128xbf16, #tpu.memory_space<vmem>>, vector<1x16x128xbf16>
    %49 = vector.shape_cast %48 : vector<1x16x128xbf16> to vector<16x128xbf16>
    %50 = vector.shape_cast %47 : vector<16x128xbf16> to vector<1x16x128xbf16>
    tpu.vector_store %arg6[%c0_49, %c0_50, %c0_51], %50 {strides = array<i32>} : memref<1x16x128xbf16, #tpu.memory_space<vmem>>, vector<1x16x128xbf16>,
    return
  }
  func.func @transform_0(%arg0: i32) -> (i32, i32, i32) {
    %c0_i32 = arith.constant 0 : i32
    %c0_i32_0 = arith.constant 0 : i32
    %c0_i32_1 = arith.constant 0 : i32
    return %arg0, %c0_i32, %c0_i32_0 : i32, i32, i32
  }
  func.func @transform_1(%arg0: i32) -> (i32, i32, i32) {
    %c0_i32 = arith.constant 0 : i32
    %c0_i32_0 = arith.constant 0 : i32
    %c0_i32_1 = arith.constant 0 : i32
    %c0_i32_2 = arith.constant 0 : i32
    return %c0_i32, %c0_i32_0, %c0_i32_1 : i32, i32, i32
  }
  func.func @transform_2(%arg0: i32) -> (i32, i32) {
    %c0_i32 = arith.constant 0 : i32
    %c0_i32_0 = arith.constant 0 : i32
    %c0_i32_1 = arith.constant 0 : i32
    return %c0_i32, %c0_i32_0 : i32, i32
  }
  func.func @transform_3(%arg0: i32) -> (i32, i32, i32) {
    %c0_i32 = arith.constant 0 : i32
    %c0_i32_0 = arith.constant 0 : i32
    %c0_i32_1 = arith.constant 0 : i32
    %c0_i32_2 = arith.constant 0 : i32
    return %c0_i32, %c0_i32_0, %c0_i32_1 : i32, i32, i32
  }
  func.func @transform_4(%arg0: i32) -> (i32, i32) {
    %c0_i32 = arith.constant 0 : i32
    %c0_i32_0 = arith.constant 0 : i32
    %c0_i32_1 = arith.constant 0 : i32
    return %c0_i32, %c0_i32_0 : i32, i32
  }
  func.func @transform_5(%arg0: i32) -> (i32, i32, i32) {
    %c0_i32 = arith.constant 0 : i32
    %c0_i32_0 = arith.constant 0 : i32
    %c0_i32_1 = arith.constant 0 : i32
    return %arg0, %c0_i32, %c0_i32_0 : i32, i32, i32
  }
}

</mosaic_0001>

<llo_original>
// kernel: tpu_custom_call.1
$region0: #{tpu_custom_call.1}
  #allocation0 [shape = 'u32[]', space=smem, size = 0x4, offset = 0x4, fixed_abs, tag = 'smem constant byte address 0x4 - core index']
  #allocation1 [shape = 'u32[72,128]{1,0:T(1,128)}', space=vmem, size = 0x9000, scoped, tag = 'internal scratch']
  #allocation2 [shape = 'bf16[18,72]{1,0:T(8,128)(2,1)}', space=vmem, size = 0x1800, scoped, tag = 'scratch operand']
  #allocation3 [shape = 'bf16[18,144]{1,0:T(8,128)(2,1)}', space=vmem, size = 0x3000, scoped, tag = 'scratch operand']
  %s0 = inlined_call_operand.hbm [shape: bf16[2,16,64], index: 0, kind: input, shape index: {}]
  %s1 = inlined_call_operand.hbm [shape: bf16[3,72,128], index: 1, kind: input, shape index: {}]
  %s2 = inlined_call_operand.vmem [shape: f32[1,128], index: 2, kind: input, shape index: {}]
  %s3 = inlined_call_operand.hbm [shape: bf16[3,144,128], index: 3, kind: input, shape index: {}]
  %s4 = inlined_call_operand.vmem [shape: f32[1,128], index: 4, kind: input, shape index: {}]
  %s5 = inlined_call_operand.hbm [shape: bf16[2,16,128], index: 5, kind: output, shape index: {}]
  %s6 = sld [smem:[#allocation0]]
  $region65: #{tpu_custom_call.1} parent=0
    _
  %s8 = ssub.s32 1, %s6
  %s9 = scalar_select 0, %s8, %s6
  $region1: #{tpu_custom_call.1} parent=0
    #allocation4 [shape = 'u8[8192]{0}', space=vmem, size = 0x2000, scoped, tag = 'input window, operand 0']
    #allocation5 [shape = 's32[2]{0}', space=sflag, size = 0x8, scoped, tag = 'scoped memory for tpu_custom_call.1']
    #allocation6 [shape = 's32[2]{0}', space=sflag, size = 0x8, scoped, tag = 'scoped memory for tpu_custom_call.1']
    #allocation7 [shape = 'u8[55296]{0}', space=vmem, size = 0xd800, scoped, tag = 'input window, operand 1, single buffered']
    #allocation8 [shape = 's32[1]{0}', space=sflag, size = 0x4, scoped, tag = 'scoped memory for tpu_custom_call.1']
    #allocation9 [shape = 'u8[110592]{0}', space=vmem, size = 0x1b000, scoped, tag = 'input window, operand 3, single buffered']
    #allocation10 [shape = 'u8[8192]{0}', space=vmem, size = 0x2000, scoped, tag = 'output window, operand 0']
    %10 = vsyncpa [#allocation5], 0
    %s11 = scalar_lea.sflag [#allocation5], 1
    %12 = vsyncpa %s11, 0
    %13 = vsyncpa [#allocation8], 0
    %14 = vsyncpa [#allocation6], 0
    %s15 = scalar_lea.sflag [#allocation6], 1
    %16 = vsyncpa %s15, 0
    loop: start=0, step=1, limit=4
    $region2: #{tpu_custom_call.1} parent=1 // loop_pre_header
      _
    $region3: #{tpu_custom_call.1} parent=1 // loop_header
      %s18 = sphi 0, %s22
      %p19 = scmp.ge.s32.totalorder %s18, 4
      %s28 = sphi 0, %s30
      %s31 = sphi 0, %s28
      %s32 = sphi 0, %s31
      %s48 = sphi 0, %s32
      %s52 = sphi 0, %s52
      %s54 = sphi 0, %s52
      %s55 = sphi 0, %s54
      %s69 = sphi 0, %s55
      %s73 = sphi 0, %s73
      %s75 = sphi 0, %s73
      %s76 = sphi 0, %s75
      %s90 = sphi 0, %s76
      %s94 = sphi 0, %s94
      %s96 = sphi 0, %s94
      %s97 = sphi 0, %s96
      %s111 = sphi 0, %s97
      %s115 = sphi 0, %s115
      %s117 = sphi 0, %s115
      %s118 = sphi 0, %s117
      %s132 = sphi 0, %s118
      %s138 = sphi 0, %s140
      %s141 = sphi 0, %s138
      %s142 = sphi 0, %s141
      %s158 = sphi 0, %s142
    $region4: #{tpu_custom_call.1} parent=1 // loop_header_branch
      %21 = sbr.rel (%p19) target = $region8
    $region5: #{tpu_custom_call.1} parent=1 // loop_body
      %s23 = ssub.s32 %s18, 1
      %s24 = ssub.s32 %s18, 2
      %s25 = sadd.s32 %s18, 1
      %s26 = ssub.s32 %s18, %s25
      %p27 = scmp.eq.s32.totalorder %s26, 0
      %s29 = sadd.s32 %s28, 1
      %s30 = scalar_select %p27, %s28, %s29
      %p33 = pneg %p27
      %p34 = scmp.eq.s32.totalorder %s18, 1
      %p35 = por %p33, %p34
      %p36 = scmp.ne.s32.totalorder %s28, %s31
      %p37 = scmp.eq.s32.totalorder %s18, 0
      %p38 = por %p36, %p37
      %p39 = scmp.ne.s32.totalorder %s28, %s31
      %p40 = scmp.eq.s32.totalorder %s23, 1
      %p41 = por %p39, %p40
      %p42 = scmp.ne.s32.totalorder %s31, %s32
      %p43 = scmp.eq.s32.totalorder %s23, 0
      %p44 = por %p42, %p43
      %p45 = scmp.ne.s32.totalorder %s31, %s32
      %p46 = scmp.eq.s32.totalorder %s24, 1
      %p47 = por %p45, %p46
      %p49 = scmp.ne.s32.totalorder %s32, %s48
      %p50 = scmp.eq.s32.totalorder %s24, 0
      %p51 = por %p49, %p50
      %s53 = sadd.s32 %s52, 1
      %p56 = scmp.eq.s32.totalorder %s18, 1
      %p57 = scmp.ne.s32.totalorder %s52, %s54
      %p58 = scmp.eq.s32.totalorder %s18, 0
      %p59 = por %p57, %p58
      %p60 = scmp.ne.s32.totalorder %s52, %s54
      %p61 = scmp.eq.s32.totalorder %s23, 1
      %p62 = por %p60, %p61
      %p63 = scmp.ne.s32.totalorder %s54, %s55
      %p64 = scmp.eq.s32.totalorder %s23, 0
      %p65 = por %p63, %p64
      %p66 = scmp.ne.s32.totalorder %s54, %s55
      %p67 = scmp.eq.s32.totalorder %s24, 1
      %p68 = por %p66, %p67
      %p70 = scmp.ne.s32.totalorder %s55, %s69
      %p71 = scmp.eq.s32.totalorder %s24, 0
      %p72 = por %p70, %p71
      %s74 = sadd.s32 %s73, 1
      %p77 = scmp.eq.s32.totalorder %s18, 1
      %p78 = scmp.ne.s32.totalorder %s73, %s75
      %p79 = scmp.eq.s32.totalorder %s18, 0
      %p80 = por %p78, %p79
      %p81 = scmp.ne.s32.totalorder %s73, %s75
      %p82 = scmp.eq.s32.totalorder %s23, 1
      %p83 = por %p81, %p82
      %p84 = scmp.ne.s32.totalorder %s75, %s76
      %p85 = scmp.eq.s32.totalorder %s23, 0
      %p86 = por %p84, %p85
      %p87 = scmp.ne.s32.totalorder %s75, %s76
      %p88 = scmp.eq.s32.totalorder %s24, 1
      %p89 = por %p87, %p88
      %p91 = scmp.ne.s32.totalorder %s76, %s90
      %p92 = scmp.eq.s32.totalorder %s24, 0
      %p93 = por %p91, %p92
      %s95 = sadd.s32 %s94, 1
      %p98 = scmp.eq.s32.totalorder %s18, 1
      %p99 = scmp.ne.s32.totalorder %s94, %s96
      %p100 = scmp.eq.s32.totalorder %s18, 0
      %p101 = por %p99, %p100
      %p102 = scmp.ne.s32.totalorder %s94, %s96
      %p103 = scmp.eq.s32.totalorder %s23, 1
      %p104 = por %p102, %p103
      %p105 = scmp.ne.s32.totalorder %s96, %s97
      %p106 = scmp.eq.s32.totalorder %s23, 0
      %p107 = por %p105, %p106
      %p108 = scmp.ne.s32.totalorder %s96, %s97
      %p109 = scmp.eq.s32.totalorder %s24, 1
      %p110 = por %p108, %p109
      %p112 = scmp.ne.s32.totalorder %s97, %s111
      %p113 = scmp.eq.s32.totalorder %s24, 0
      %p114 = por %p112, %p113
      %s116 = sadd.s32 %s115, 1
      %p119 = scmp.eq.s32.totalorder %s18, 1
      %p120 = scmp.ne.s32.totalorder %s115, %s117
      %p121 = scmp.eq.s32.totalorder %s18, 0
      %p122 = por %p120, %p121
      %p123 = scmp.ne.s32.totalorder %s115, %s117
      %p124 = scmp.eq.s32.totalorder %s23, 1
      %p125 = por %p123, %p124
      %p126 = scmp.ne.s32.totalorder %s117, %s118
      %p127 = scmp.eq.s32.totalorder %s23, 0
      %p128 = por %p126, %p127
      %p129 = scmp.ne.s32.totalorder %s117, %s118
      %p130 = scmp.eq.s32.totalorder %s24, 1
      %p131 = por %p129, %p130
      %p133 = scmp.ne.s32.totalorder %s118, %s132
      %p134 = scmp.eq.s32.totalorder %s24, 0
      %p135 = por %p133, %p134
      %s136 = ssub.s32 %s18, %s25
      %p137 = scmp.eq.s32.totalorder %s136, 0
      %s139 = sadd.s32 %s138, 1
      %s140 = scalar_select %p137, %s138, %s139
      %p143 = pneg %p137
      %p144 = scmp.eq.s32.totalorder %s18, 1
      %p145 = por %p143, %p144
      %p146 = scmp.ne.s32.totalorder %s138, %s141
      %p147 = scmp.eq.s32.totalorder %s18, 0
      %p148 = por %p146, %p147
      %p149 = scmp.ne.s32.totalorder %s138, %s141
      %p150 = scmp.eq.s32.totalorder %s23, 1
      %p151 = por %p149, %p150
      %p152 = scmp.ne.s32.totalorder %s141, %s142
      %p153 = scmp.eq.s32.totalorder %s23, 0
      %p154 = por %p152, %p153
      %p155 = scmp.ne.s32.totalorder %s141, %s142
      %p156 = scmp.eq.s32.totalorder %s24, 1
      %p157 = por %p155, %p156
      %p159 = scmp.ne.s32.totalorder %s142, %s158
      %p160 = scmp.eq.s32.totalorder %s24, 0
      %p161 = por %p159, %p160
      %p162 = scmp.le.s32.totalorder 1, %s18
      %p163 = scmp.lt.s32.totalorder %s18, 3
      %p164 = pnand %p162, %p163
      %p165 = pneg %p164
      // Predicated region
      $region9: #{tpu_custom_call.1} parent=5 // pred_check
        _
      $region10: #{tpu_custom_call.1} parent=5 // pred_check_branch
        %167 = sbr.rel (%p164) target = $region12
      $region11: #{tpu_custom_call.1} parent=5 // pred_region
        %s168 = ssub.s32 %s18, 1
        // Predicated region
        $region13: #{tpu_custom_call.1} parent=11 // pred_check
          %p169 = pneg %p65
        $region14: #{tpu_custom_call.1} parent=11 // pred_check_branch
          %171 = sbr.rel (%p169) target = $region16
        $region15: #{tpu_custom_call.1} parent=11 // pred_region
          %173 = vsyncadd [#allocation8], 0
          %s174 = sshll.u32 %s1, 4
          %s175 = int_to_ptr.hbm [resolvable:$true] %s174
          %s176 = sshll.u32 [#allocation7], 4
          %s177 = int_to_ptr.vmem [resolvable:$true] %s176
          %182 = dma.hbm_to_vmem [thread:$0]  %s175, 1728, %s177, [#allocation8], 64, 64, 4
        $region16: #{tpu_custom_call.1} parent=11 // pred_fallthru
          _
        // Predicated region
        $region17: #{tpu_custom_call.1} parent=11 // pred_check
          %p183 = pneg %p86
        $region18: #{tpu_custom_call.1} parent=11 // pred_check_branch
          %185 = sbr.rel (%p183) target = $region20
        $region19: #{tpu_custom_call.1} parent=11 // pred_region
          _
        $region20: #{tpu_custom_call.1} parent=11 // pred_fallthru
          _
        // Predicated region
        $region21: #{tpu_custom_call.1} parent=11 // pred_check
          %p186 = pneg %p107
        $region22: #{tpu_custom_call.1} parent=11 // pred_check_branch
          %188 = sbr.rel (%p186) target = $region24
        $region23: #{tpu_custom_call.1} parent=11 // pred_region
          %190 = vsyncadd [#allocation8], 0
          %s191 = sshll.u32 %s3, 4
          %s192 = int_to_ptr.hbm [resolvable:$true] %s191
          %s193 = sshll.u32 [#allocation9], 4
          %s194 = int_to_ptr.vmem [resolvable:$true] %s193
          %199 = dma.hbm_to_vmem [thread:$0]  %s192, 3456, %s194, [#allocation8], 64, 64, 4
        $region24: #{tpu_custom_call.1} parent=11 // pred_fallthru
          _
        // Predicated region
        $region25: #{tpu_custom_call.1} parent=11 // pred_check
          %p200 = pneg %p128
        $region26: #{tpu_custom_call.1} parent=11 // pred_check_branch
          %202 = sbr.rel (%p200) target = $region28
        $region27: #{tpu_custom_call.1} parent=11 // pred_region
          _
        $region28: #{tpu_custom_call.1} parent=11 // pred_fallthru
          _
      $region12: #{tpu_custom_call.1} parent=5 // pred_fallthru
        _
      %p203 = scmp.lt.s32.totalorder %s18, 2
      // Predicated region
      $region29: #{tpu_custom_call.1} parent=5 // pred_check
        %p204 = pneg %p203
      $region30: #{tpu_custom_call.1} parent=5 // pred_check_branch
        %206 = sbr.rel (%p204) target = $region32
      $region31: #{tpu_custom_call.1} parent=5 // pred_region
        // Predicated region
        $region33: #{tpu_custom_call.1} parent=31 // pred_check
          %p207 = pneg %p38
        $region34: #{tpu_custom_call.1} parent=31 // pred_check_branch
          %209 = sbr.rel (%p207) target = $region36
        $region35: #{tpu_custom_call.1} parent=31 // pred_region
          %s210 = sand.u32 %s28, 1
          %s211 = scalar_lea.sflag [#allocation5], %s210
          %s212 = sand.u32 %s28, 1
          %s213 = smul.addr %s212, 8
          %s214 = scalar_lea.vmem [#allocation4], %s213
          %216 = vsyncadd %s211, 0
          %s217 = smul.addr %s18, 2
          %s218 = smul.addr %s217, 4
          %s219 = scalar_lea.hbm %s0, %s218
          %s220 = sshll.u32 %s219, 4
          %s221 = int_to_ptr.hbm [resolvable:$true] %s220
          %s222 = sshll.u32 %s214, 4
          %s223 = int_to_ptr.vmem [resolvable:$true] %s222
          %228 = dma.hbm_to_vmem [thread:$0]  %s221, 128, %s223, %s211, 64, 64, 4
        $region36: #{tpu_custom_call.1} parent=31 // pred_fallthru
          _
      $region32: #{tpu_custom_call.1} parent=5 // pred_fallthru
        _
      %p229 = scmp.le.s32.totalorder 1, %s18
      %p230 = scmp.lt.s32.totalorder %s18, 3
      %p231 = pnand %p229, %p230
      %p232 = pneg %p231
      // Predicated region
      $region37: #{tpu_custom_call.1} parent=5 // pred_check
        _
      $region38: #{tpu_custom_call.1} parent=5 // pred_check_branch
        %234 = sbr.rel (%p231) target = $region40
      $region39: #{tpu_custom_call.1} parent=5 // pred_region
        %s235 = ssub.s32 %s18, 1
        %s236 = sand.u32 %s31, 1
        %s237 = scalar_lea.sflag [#allocation5], %s236
        %s238 = sand.u32 %s31, 1
        %s239 = smul.addr %s238, 8
        %s240 = scalar_lea.vmem [#allocation4], %s239
        // Predicated region
        $region41: #{tpu_custom_call.1} parent=39 // pred_check
          %p241 = pneg %p44
        $region42: #{tpu_custom_call.1} parent=39 // pred_check_branch
          %243 = sbr.rel (%p241) target = $region44
        $region43: #{tpu_custom_call.1} parent=39 // pred_region
          %245 = dma.done %s237, 128
        $region44: #{tpu_custom_call.1} parent=39 // pred_fallthru
          _
        // Predicated region
        $region45: #{tpu_custom_call.1} parent=39 // pred_check
          %p246 = pneg %p65
        $region46: #{tpu_custom_call.1} parent=39 // pred_check_branch
          %248 = sbr.rel (%p246) target = $region48
        $region47: #{tpu_custom_call.1} parent=39 // pred_region
          %250 = dma.done [#allocation8], 1728
        $region48: #{tpu_custom_call.1} parent=39 // pred_fallthru
          _
        // Predicated region
        $region49: #{tpu_custom_call.1} parent=39 // pred_check
          %p251 = pneg %p107
        $region50: #{tpu_custom_call.1} parent=39 // pred_check_branch
          %253 = sbr.rel (%p251) target = $region52
        $region51: #{tpu_custom_call.1} parent=39 // pred_region
          %255 = dma.done [#allocation8], 3456
        $region52: #{tpu_custom_call.1} parent=39 // pred_fallthru
          _
        %s256 = sand.u32 %s31, 1
        %s257 = scalar_lea.sflag [#allocation5], %s256
        %s258 = sand.u32 %s31, 1
        %s259 = smul.addr %s258, 8
        %s260 = scalar_lea.vmem [#allocation4], %s259
        %p261 = pneg %p44
        %p262 = pneg %p41
        %p263 = pneg %p65
        %p264 = pneg %p62
        %p265 = pneg %p86
        %p266 = pneg %p83
        %p267 = pneg %p107
        %p268 = pneg %p104
        %p269 = pneg %p128
        %p270 = pneg %p125
        %p271 = pneg %p154
        %p272 = pneg %p151
        %s273 = sand.u32 %s141, 1
        %s274 = scalar_lea.sflag [#allocation6], %s273
        %s275 = sand.u32 %s141, 1
        %s276 = smul.addr %s275, 8
        %s277 = scalar_lea.vmem [#allocation10], %s276
        %vm279 = vcmask 584704
        %280 = vst.msk [vmem:[#allocation2] sm:$0xf] %vm279, 0
        %281 = vst.msk [vmem:[#allocation2 + $0x4] sm:$0xf] %vm279, 0
        %vm282 = vcmask 581632
        %283 = vst.msk [vmem:[#allocation2 + $0x8] sm:$0x1] %vm282, 0
        %v284 = vld [vmem:[%s240] sm:$0xf]
        %v285 = vld [vmem:[%s240 + $0x4] sm:$0xf]
        %vm286 = vsmask.f32 256
        %vm287 = vsmask.f32 4368
        %vm288 = vmor %vm286, %vm287
        %v290 = vshrl.u32 %v284, 16
        %v292 = vrot.slane %v290, 7
        %v293 = vshll.u32 %v284, 16
        %v295 = vor.u32 %v292, %v293
        %v296 = vrot.slane %v292, 4
        %v298 = vshrl.u32 %v285, 16
        %v300 = vrot.slane %v298, 7
        %v301 = vshll.u32 %v285, 16
        %v303 = vor.u32 %v300, %v301
        %v304 = vsel %vm288, %v296, %v303
        %v305 = vrot.slane %v300, 4
        %306 = vrot.lane.b32.xlu0 %v295, 4
        %v307 = vpop.permute.xlu0 %306
        %308 = vrot.lane.b32.xlu0 %v304, 4
        %v309 = vpop.permute.xlu0 %308
        %310 = vrot.lane.b32.xlu0 %v305, 4
        %v311 = vpop.permute.xlu0 %310
        %vm315 = vcmask 551968
        %vm316 = vsmask.f32 7938
        %vm317 = vmand %vm315, %vm316
        %v318 = vld [vmem:[#allocation2] sm:$0xf]
        %v319 = vsel %vm317, %v307, %v318
        %320 = vst [vmem:[#allocation2] sm:$0xf] %v319
        %vm321 = vcmask 551968
        %322 = vst.msk [vmem:[#allocation2 + $0x4] sm:$0xf] %vm321, %v309
        %vm323 = vcmask 548896
        %vm324 = vmand %vm323, %vm286
        %v325 = vld [vmem:[#allocation2 + $0x8] sm:$0x1]
        %v326 = vsel %vm324, %v311, %v325
        %327 = vst [vmem:[#allocation2 + $0x8] sm:$0x1] %v326
        %v328 = vld [vmem:[#allocation2] sm:$0xf]
        %v329 = vld [vmem:[#allocation2 + $0x4] sm:$0xf]
        %v330 = vld [vmem:[#allocation7] sm:$0xf]
        %v331 = vld [vmem:[#allocation7 + $0x4] sm:$0xf]
        %v332 = vld [vmem:[#allocation7 + $0x8] sm:$0xf]
        %v333 = vld [vmem:[#allocation7 + $0xc] sm:$0xf]
        %v334 = vld [vmem:[#allocation7 + $0x10] sm:$0xf]
        %v335 = vld [vmem:[#allocation7 + $0x14] sm:$0xf]
        %v336 = vld [vmem:[#allocation7 + $0x18] sm:$0xf]
        %v337 = vld [vmem:[#allocation7 + $0x1c] sm:$0xf]
        %v338 = vld [vmem:[#allocation7 + $0x20] sm:$0xf]
        %v339 = vld [vmem:[#allocation2 + $0x8] sm:$0x1]
        %s340 = scalar_lea.vmem [#allocation7], 36
        %v341 = vld [vmem:[%s340] sm:$0xf]
        %v342 = vld [vmem:[%s340 + $0x4] sm:$0xf]
        %v343 = vld [vmem:[%s340 + $0x8] sm:$0xf]
        %v344 = vld [vmem:[%s340 + $0xc] sm:$0xf]
        %v345 = vld [vmem:[%s340 + $0x10] sm:$0xf]
        %v346 = vld [vmem:[%s340 + $0x14] sm:$0xf]
        %v347 = vld [vmem:[%s340 + $0x18] sm:$0xf]
        %v348 = vld [vmem:[%s340 + $0x1c] sm:$0xf]
        %v349 = vld [vmem:[%s340 + $0x20] sm:$0xf]
        %v353 = vunpack.c.l.b16 %v328
        %v354 = vunpack.c.l.b16 %v329
        %v355 = vunpack.c.l.b16 %v339
        %v356 = vpack.c.b16 %v354, %v353
        %v357 = vpack.c.b16 %v355, %v355
        %vm358 = vsmask.f32 7424
        %v360 = vshrl.u32 %v356, 16
        %v362 = vshll.u32 %v356, 16
        %v364 = vrot.slane %v362, 1
        %v365 = vor.u32 %v360, %v364
        %v367 = vshll.u32 %v357, 16
        %v369 = vrot.slane %v367, 1
        %v370 = vsel %vm358, %v365, %v369
        %v380 = vunpack.c.l.b16 %v341
        %v381 = vunpack.c.l.b16 %v342
        %v382 = vunpack.c.l.b16 %v343
        %v383 = vunpack.c.l.b16 %v344
        %v384 = vunpack.c.l.b16 %v345
        %v385 = vunpack.c.l.b16 %v346
        %v386 = vunpack.c.l.b16 %v347
        %v387 = vunpack.c.l.b16 %v348
        %v388 = vunpack.c.l.b16 %v349
        %v389 = vpack.c.b16 %v381, %v380
        %v390 = vpack.c.b16 %v383, %v382
        %v391 = vpack.c.b16 %v385, %v384
        %v392 = vpack.c.b16 %v387, %v386
        %v393 = vpack.c.b16 %v388, %v388
        %vm398 = vcmask 588800
        %v400 = vsel %vm398, %v370, 0
        %vm402 = vcmask 1043456
        %v404 = vsel %vm402, %v393, 0
        %406 = vmatpush.bf16.msra.mxu0 0
        %407 = vmatpush.bf16.msra.mxu0 0
        %408 = vmatpush.bf16.msra.mxu0 0
        %409 = vmatpush.bf16.msra.mxu0 %v404
        %410 = vmatpush.bf16.msra.mxu0 %v392
        %411 = vmatpush.bf16.msra.mxu0 %v391
        %412 = vmatpush.bf16.msra.mxu0 %v390
        %413 = vmatpush.bf16.msra.mxu0 %v389
        %414 = vmatmul.bf16.gmra.mxu0 %v400
        %v415 = vpop.f32.mrf.mxu0
        %v416 = vadd.f32 0.0, %v415
        %v417 = vpop.f32.mrf.mxu0
        %v418 = vadd.f32 0.0, %v417
        %419 = vdwg.mxu0
        %v429 = vunpack.c.l.b16 %v330
        %v430 = vunpack.c.l.b16 %v331
        %v431 = vunpack.c.l.b16 %v332
        %v432 = vunpack.c.l.b16 %v333
        %v433 = vunpack.c.l.b16 %v334
        %v434 = vunpack.c.l.b16 %v335
        %v435 = vunpack.c.l.b16 %v336
        %v436 = vunpack.c.l.b16 %v337
        %v437 = vunpack.c.l.b16 %v338
        %v438 = vpack.c.b16 %v430, %v429
        %v439 = vpack.c.b16 %v432, %v431
        %v440 = vpack.c.b16 %v434, %v433
        %v441 = vpack.c.b16 %v436, %v435
        %v442 = vpack.c.b16 %v437, %v437
        %v447 = vsel %vm398, %v356, 0
        %v450 = vsel %vm402, %v442, 0
        %452 = vmatpush.bf16.msra.mxu0 0
        %453 = vmatpush.bf16.msra.mxu0 0
        %454 = vmatpush.bf16.msra.mxu0 0
        %455 = vmatpush.bf16.msra.mxu0 %v450
        %456 = vmatpush.bf16.msra.mxu0 %v441
        %457 = vmatpush.bf16.msra.mxu0 %v440
        %458 = vmatpush.bf16.msra.mxu0 %v439
        %459 = vmatpush.bf16.msra.mxu0 %v438
        %460 = vmatmul.bf16.gmra.mxu0 %v447
        %v461 = vpop.f32.mrf.mxu0
        %v462 = vadd.f32 %v416, %v461
        %v463 = vpop.f32.mrf.mxu0
        %v464 = vadd.f32 %v418, %v463
        %465 = vdwg.mxu0
        %v466 = vld [vmem:[#allocation2] sm:$0xe]
        %s467 = scalar_lea.vmem [#allocation7], 72
        %v468 = vld [vmem:[%s467] sm:$0xf]
        %v469 = vld [vmem:[%s467 + $0x4] sm:$0xf]
        %v470 = vld [vmem:[%s467 + $0x8] sm:$0xf]
        %v471 = vld [vmem:[%s467 + $0xc] sm:$0xf]
        %v472 = vld [vmem:[%s467 + $0x10] sm:$0xf]
        %v473 = vld [vmem:[%s467 + $0x14] sm:$0xf]
        %v474 = vld [vmem:[%s467 + $0x18] sm:$0xf]
        %v475 = vld [vmem:[%s467 + $0x1c] sm:$0xf]
        %v476 = vld [vmem:[%s467 + $0x20] sm:$0xf]
        %v478 = vunpack.c.l.b16 %v466
        %v479 = vpack.c.b16 %v354, %v478
        %vm480 = vcmask 1046528
        %v481 = vrot.slane %v479, 1
        %v482 = vrot.slane %v357, 1
        %v483 = vsel %vm480, %v481, %v482
        %v493 = vunpack.c.l.b16 %v468
        %v494 = vunpack.c.l.b16 %v469
        %v495 = vunpack.c.l.b16 %v470
        %v496 = vunpack.c.l.b16 %v471
        %v497 = vunpack.c.l.b16 %v472
        %v498 = vunpack.c.l.b16 %v473
        %v499 = vunpack.c.l.b16 %v474
        %v500 = vunpack.c.l.b16 %v475
        %v501 = vunpack.c.l.b16 %v476
        %v502 = vpack.c.b16 %v494, %v493
        %v503 = vpack.c.b16 %v496, %v495
        %v504 = vpack.c.b16 %v498, %v497
        %v505 = vpack.c.b16 %v500, %v499
        %v506 = vpack.c.b16 %v501, %v501
        %v512 = vsel %vm398, %v483, 0
        %v515 = vsel %vm402, %v506, 0
        %517 = vmatpush.bf16.msra.mxu0 0
        %518 = vmatpush.bf16.msra.mxu0 0
        %519 = vmatpush.bf16.msra.mxu0 0
        %520 = vmatpush.bf16.msra.mxu0 %v515
        %521 = vmatpush.bf16.msra.mxu0 %v505
        %522 = vmatpush.bf16.msra.mxu0 %v504
        %523 = vmatpush.bf16.msra.mxu0 %v503
        %524 = vmatpush.bf16.msra.mxu0 %v502
        %525 = vmatmul.bf16.gmra.mxu0 %v512
        %v526 = vpop.f32.mrf.mxu0
        %v527 = vadd.f32 0.0, %v526
        %v528 = vpop.f32.mrf.mxu0
        %v529 = vadd.f32 0.0, %v528
        %530 = vdwg.mxu0
        %v531 = vadd.f32 %v462, %v527
        %v532 = vadd.f32 %v464, %v529
        %v533 = vld [vmem:[%s2] sm:$0x1]
        %v535 = vperm.slane %v533, 0
        %v537 = vadd.f32 %v531, %v535
        %v538 = vadd.f32 %v532, %v535
        %v539 = vmax.f32 %v537, 0.0
        %v540 = vmax.f32 %v538, 0.0
        %vm541 = vcmask 130052
        %vm542 = vmor %vm541, %vm402
        %543 = vst.msk [vmem:[#allocation3] sm:$0xff] %vm542, 0
        %544 = vst.msk [vmem:[#allocation3 + $0x8] sm:$0xff] %vm542, 0
        %vm545 = vcmask 1040384
        %vm546 = vcmask 126980
        %vm547 = vmor %vm546, %vm545
        %548 = vst.msk [vmem:[#allocation3 + $0x10] sm:$0x11] %vm547, 0
        %v549 = vpack.c.bf16 %v539, %v539
        %v550 = vpack.c.bf16 %v540, %v540
        %v552 = vshrl.u32 %v549, 16
        %v554 = vrot.slane %v552, 7
        %v555 = vshll.u32 %v549, 16
        %v557 = vor.u32 %v554, %v555
        %v558 = vrot.slane %v554, 4
        %v560 = vshrl.u32 %v550, 16
        %v562 = vrot.slane %v560, 7
        %v563 = vshll.u32 %v550, 16
        %v565 = vor.u32 %v562, %v563
        %v566 = vsel %vm288, %v558, %v565
        %v567 = vrot.slane %v562, 4
        %568 = vrot.lane.b32.xlu0 %v557, 8
        %v569 = vpop.permute.xlu0 %568
        %570 = vrot.lane.b32.xlu0 %v566, 8
        %v571 = vpop.permute.xlu0 %570
        %572 = vrot.lane.b32.xlu0 %v567, 8
        %v573 = vpop.permute.xlu0 %572
        %v574 = vrot.slane %v569, 4
        %v575 = vrot.slane %v571, 4
        %v576 = vrot.slane %v573, 4
        %vm577 = vcmask 64512
        %v578 = vsel %vm577, %v574, %v569
        %v579 = vsel %vm577, %v575, %v571
        %v580 = vsel %vm577, %v576, %v573
        %vm584 = vcmask 1043520
        %vm585 = vmand %vm584, %vm316
        %vm586 = vcmask 64516
        %vm587 = vsmask.f32 7954
        %vm588 = vmand %vm586, %vm587
        %vm589 = vmor %vm588, %vm585
        %v590 = vld [vmem:[#allocation3] sm:$0xff]
        %v591 = vsel %vm589, %v578, %v590
        %592 = vst [vmem:[#allocation3] sm:$0xff] %v591
        %vm593 = vcmask 1043520
        %vm594 = vcmask 64516
        %vm595 = vmor %vm594, %vm593
        %596 = vst.msk [vmem:[#allocation3 + $0x8] sm:$0xff] %vm595, %v579
        %vm597 = vcmask 1040448
        %vm598 = vmand %vm597, %vm286
        %vm599 = vcmask 61444
        %vm600 = vsmask.f32 4352
        %vm601 = vmand %vm599, %vm600
        %vm602 = vmor %vm601, %vm598
        %v603 = vld [vmem:[#allocation3 + $0x10] sm:$0x11]
        %v604 = vsel %vm602, %v580, %v603
        %605 = vst [vmem:[#allocation3 + $0x10] sm:$0x11] %v604
        %v606 = vld [vmem:[#allocation3] sm:$0xff]
        %v607 = vld [vmem:[#allocation3 + $0x8] sm:$0xff]
        %v608 = vld [vmem:[#allocation9] sm:$0xf]
        %v609 = vld [vmem:[#allocation9 + $0x4] sm:$0xf]
        %v610 = vld [vmem:[#allocation9 + $0x8] sm:$0xf]
        %v611 = vld [vmem:[#allocation9 + $0xc] sm:$0xf]
        %v612 = vld [vmem:[#allocation9 + $0x10] sm:$0xf]
        %v613 = vld [vmem:[#allocation9 + $0x14] sm:$0xf]
        %v614 = vld [vmem:[#allocation9 + $0x18] sm:$0xf]
        %v615 = vld [vmem:[#allocation9 + $0x1c] sm:$0xf]
        %v616 = vld [vmem:[#allocation9 + $0x20] sm:$0xf]
        %v617 = vld [vmem:[#allocation9 + $0x24] sm:$0xf]
        %v618 = vld [vmem:[#allocation9 + $0x28] sm:$0xf]
        %v619 = vld [vmem:[#allocation9 + $0x2c] sm:$0xf]
        %v620 = vld [vmem:[#allocation9 + $0x30] sm:$0xf]
        %v621 = vld [vmem:[#allocation9 + $0x34] sm:$0xf]
        %v622 = vld [vmem:[#allocation9 + $0x38] sm:$0xf]
        %v623 = vld [vmem:[#allocation9 + $0x3c] sm:$0xf]
        %v624 = vld [vmem:[#allocation9 + $0x40] sm:$0xf]
        %v625 = vld [vmem:[#allocation9 + $0x44] sm:$0xf]
        %v626 = vld [vmem:[#allocation3 + $0x10] sm:$0x11]
        %s627 = scalar_lea.vmem [#allocation9], 72
        %v628 = vld [vmem:[%s627] sm:$0xf]
        %v629 = vld [vmem:[%s627 + $0x4] sm:$0xf]
        %v630 = vld [vmem:[%s627 + $0x8] sm:$0xf]
        %v631 = vld [vmem:[%s627 + $0xc] sm:$0xf]
        %v632 = vld [vmem:[%s627 + $0x10] sm:$0xf]
        %v633 = vld [vmem:[%s627 + $0x14] sm:$0xf]
        %v634 = vld [vmem:[%s627 + $0x18] sm:$0xf]
        %v635 = vld [vmem:[%s627 + $0x1c] sm:$0xf]
        %v636 = vld [vmem:[%s627 + $0x20] sm:$0xf]
        %v637 = vld [vmem:[%s627 + $0x24] sm:$0xf]
        %v638 = vld [vmem:[%s627 + $0x28] sm:$0xf]
        %v639 = vld [vmem:[%s627 + $0x2c] sm:$0xf]
        %v640 = vld [vmem:[%s627 + $0x30] sm:$0xf]
        %v641 = vld [vmem:[%s627 + $0x34] sm:$0xf]
        %v642 = vld [vmem:[%s627 + $0x38] sm:$0xf]
        %v643 = vld [vmem:[%s627 + $0x3c] sm:$0xf]
        %v644 = vld [vmem:[%s627 + $0x40] sm:$0xf]
        %v645 = vld [vmem:[%s627 + $0x44] sm:$0xf]
        %v649 = vunpack.c.l.b16 %v606
        %v650 = vunpack.c.h.b16 %v606
        %v651 = vunpack.c.l.b16 %v607
        %v652 = vunpack.c.h.b16 %v607
        %v653 = vunpack.c.l.b16 %v626
        %v654 = vunpack.c.h.b16 %v626
        %v655 = vpack.c.b16 %v651, %v649
        %v656 = vpack.c.b16 %v652, %v650
        %v657 = vpack.c.b16 %v653, %v653
        %v658 = vpack.c.b16 %v654, %v654
        %v660 = vshrl.u32 %v655, 16
        %v662 = vshll.u32 %v655, 16
        %v664 = vrot.slane %v662, 1
        %v665 = vor.u32 %v660, %v664
        %v667 = vshll.u32 %v657, 16
        %v669 = vrot.slane %v667, 1
        %v670 = vsel %vm358, %v665, %v669
        %v672 = vshrl.u32 %v656, 16
        %v674 = vshll.u32 %v656, 16
        %v676 = vrot.slane %v674, 1
        %v677 = vor.u32 %v672, %v676
        %v679 = vshll.u32 %v658, 16
        %v681 = vrot.slane %v679, 1
        %v682 = vsel %vm358, %v677, %v681
        %v702 = vunpack.c.l.b16 %v628
        %v703 = vunpack.c.l.b16 %v629
        %v704 = vunpack.c.l.b16 %v630
        %v705 = vunpack.c.l.b16 %v631
        %v706 = vunpack.c.l.b16 %v632
        %v707 = vunpack.c.l.b16 %v633
        %v708 = vunpack.c.l.b16 %v634
        %v709 = vunpack.c.l.b16 %v635
        %v710 = vunpack.c.l.b16 %v636
        %v711 = vunpack.c.l.b16 %v637
        %v712 = vunpack.c.l.b16 %v638
        %v713 = vunpack.c.l.b16 %v639
        %v714 = vunpack.c.l.b16 %v640
        %v715 = vunpack.c.l.b16 %v641
        %v716 = vunpack.c.l.b16 %v642
        %v717 = vunpack.c.l.b16 %v643
        %v718 = vunpack.c.l.b16 %v644
        %v719 = vunpack.c.l.b16 %v645
        %v720 = vpack.c.b16 %v703, %v702
        %v721 = vpack.c.b16 %v705, %v704
        %v722 = vpack.c.b16 %v707, %v706
        %v723 = vpack.c.b16 %v709, %v708
        %v724 = vpack.c.b16 %v711, %v710
        %v725 = vpack.c.b16 %v713, %v712
        %v726 = vpack.c.b16 %v715, %v714
        %v727 = vpack.c.b16 %v717, %v716
        %v728 = vpack.c.b16 %v719, %v718
        %vm738 = vcmask 130048
        %v740 = vsel %vm738, %v682, 0
        %742 = vmatpush.bf16.msra.mxu0 %v727
        %743 = vmatpush.bf16.msra.mxu0 %v726
        %744 = vmatpush.bf16.msra.mxu0 %v725
        %745 = vmatpush.bf16.msra.mxu0 %v724
        %746 = vmatpush.bf16.msra.mxu0 %v723
        %747 = vmatpush.bf16.msra.mxu0 %v722
        %748 = vmatpush.bf16.msra.mxu0 %v721
        %749 = vmatpush.bf16.msra.mxu0 %v720
        %750 = vmatmul.bf16.gmra.mxu0 %v670
        %v751 = vpop.f32.mrf.mxu0
        %v752 = vadd.f32 0.0, %v751
        %v753 = vpop.f32.mrf.mxu0
        %v754 = vadd.f32 0.0, %v753
        %755 = vdwg.mxu0
        %756 = vmatpush.bf16.msra.mxu0 0
        %757 = vmatpush.bf16.msra.mxu0 0
        %758 = vmatpush.bf16.msra.mxu0 0
        %759 = vmatpush.bf16.msra.mxu0 0
        %760 = vmatpush.bf16.msra.mxu0 0
        %761 = vmatpush.bf16.msra.mxu0 0
        %762 = vmatpush.bf16.msra.mxu0 0
        %763 = vmatpush.bf16.msra.mxu0 %v728
        %764 = vmatmul.bf16.gmra.mxu0 %v740
        %v765 = vpop.f32.mrf.mxu0
        %v766 = vadd.f32 %v752, %v765
        %v767 = vpop.f32.mrf.mxu0
        %v768 = vadd.f32 %v754, %v767
        %769 = vdwg.mxu0
        %v789 = vunpack.c.l.b16 %v608
        %v790 = vunpack.c.l.b16 %v609
        %v791 = vunpack.c.l.b16 %v610
        %v792 = vunpack.c.l.b16 %v611
        %v793 = vunpack.c.l.b16 %v612
        %v794 = vunpack.c.l.b16 %v613
        %v795 = vunpack.c.l.b16 %v614
        %v796 = vunpack.c.l.b16 %v615
        %v797 = vunpack.c.l.b16 %v616
        %v798 = vunpack.c.l.b16 %v617
        %v799 = vunpack.c.l.b16 %v618
        %v800 = vunpack.c.l.b16 %v619
        %v801 = vunpack.c.l.b16 %v620
        %v802 = vunpack.c.l.b16 %v621
        %v803 = vunpack.c.l.b16 %v622
        %v804 = vunpack.c.l.b16 %v623
        %v805 = vunpack.c.l.b16 %v624
        %v806 = vunpack.c.l.b16 %v625
        %v807 = vpack.c.b16 %v790, %v789
        %v808 = vpack.c.b16 %v792, %v791
        %v809 = vpack.c.b16 %v794, %v793
        %v810 = vpack.c.b16 %v796, %v795
        %v811 = vpack.c.b16 %v798, %v797
        %v812 = vpack.c.b16 %v800, %v799
        %v813 = vpack.c.b16 %v802, %v801
        %v814 = vpack.c.b16 %v804, %v803
        %v815 = vpack.c.b16 %v806, %v805
        %v825 = vsel %vm738, %v656, 0
        %827 = vmatpush.bf16.msra.mxu0 %v814
        %828 = vmatpush.bf16.msra.mxu0 %v813
        %829 = vmatpush.bf16.msra.mxu0 %v812
        %830 = vmatpush.bf16.msra.mxu0 %v811
        %831 = vmatpush.bf16.msra.mxu0 %v810
        %832 = vmatpush.bf16.msra.mxu0 %v809
        %833 = vmatpush.bf16.msra.mxu0 %v808
        %834 = vmatpush.bf16.msra.mxu0 %v807
        %835 = vmatmul.bf16.gmra.mxu0 %v655
        %v836 = vpop.f32.mrf.mxu0
        %v837 = vadd.f32 %v766, %v836
        %v838 = vpop.f32.mrf.mxu0
        %v839 = vadd.f32 %v768, %v838
        %840 = vdwg.mxu0
        %841 = vmatpush.bf16.msra.mxu0 0
        %842 = vmatpush.bf16.msra.mxu0 0
        %843 = vmatpush.bf16.msra.mxu0 0
        %844 = vmatpush.bf16.msra.mxu0 0
        %845 = vmatpush.bf16.msra.mxu0 0
        %846 = vmatpush.bf16.msra.mxu0 0
        %847 = vmatpush.bf16.msra.mxu0 0
        %848 = vmatpush.bf16.msra.mxu0 %v815
        %849 = vmatmul.bf16.gmra.mxu0 %v825
        %v850 = vpop.f32.mrf.mxu0
        %v851 = vadd.f32 %v837, %v850
        %v852 = vpop.f32.mrf.mxu0
        %v853 = vadd.f32 %v839, %v852
        %854 = vdwg.mxu0
        %v855 = vld [vmem:[#allocation3] sm:$0xee]
        %s856 = scalar_lea.vmem [#allocation9], 144
        %v857 = vld [vmem:[%s856] sm:$0xf]
        %v858 = vld [vmem:[%s856 + $0x4] sm:$0xf]
        %v859 = vld [vmem:[%s856 + $0x8] sm:$0xf]
        %v860 = vld [vmem:[%s856 + $0xc] sm:$0xf]
        %v861 = vld [vmem:[%s856 + $0x10] sm:$0xf]
        %v862 = vld [vmem:[%s856 + $0x14] sm:$0xf]
        %v863 = vld [vmem:[%s856 + $0x18] sm:$0xf]
        %v864 = vld [vmem:[%s856 + $0x1c] sm:$0xf]
        %v865 = vld [vmem:[%s856 + $0x20] sm:$0xf]
        %v866 = vld [vmem:[%s856 + $0x24] sm:$0xf]
        %v867 = vld [vmem:[%s856 + $0x28] sm:$0xf]
        %v868 = vld [vmem:[%s856 + $0x2c] sm:$0xf]
        %v869 = vld [vmem:[%s856 + $0x30] sm:$0xf]
        %v870 = vld [vmem:[%s856 + $0x34] sm:$0xf]
        %v871 = vld [vmem:[%s856 + $0x38] sm:$0xf]
        %v872 = vld [vmem:[%s856 + $0x3c] sm:$0xf]
        %v873 = vld [vmem:[%s856 + $0x40] sm:$0xf]
        %v874 = vld [vmem:[%s856 + $0x44] sm:$0xf]
        %v876 = vunpack.c.l.b16 %v855
        %v877 = vunpack.c.h.b16 %v855
        %v878 = vpack.c.b16 %v651, %v876
        %v879 = vpack.c.b16 %v652, %v877
        %v880 = vrot.slane %v878, 1
        %v881 = vrot.slane %v657, 1
        %v882 = vsel %vm480, %v880, %v881
        %v883 = vrot.slane %v879, 1
        %v884 = vrot.slane %v658, 1
        %v885 = vsel %vm480, %v883, %v884
        %v905 = vunpack.c.l.b16 %v857
        %v906 = vunpack.c.l.b16 %v858
        %v907 = vunpack.c.l.b16 %v859
        %v908 = vunpack.c.l.b16 %v860
        %v909 = vunpack.c.l.b16 %v861
        %v910 = vunpack.c.l.b16 %v862
        %v911 = vunpack.c.l.b16 %v863
        %v912 = vunpack.c.l.b16 %v864
        %v913 = vunpack.c.l.b16 %v865
        %v914 = vunpack.c.l.b16 %v866
        %v915 = vunpack.c.l.b16 %v867
        %v916 = vunpack.c.l.b16 %v868
        %v917 = vunpack.c.l.b16 %v869
        %v918 = vunpack.c.l.b16 %v870
        %v919 = vunpack.c.l.b16 %v871
        %v920 = vunpack.c.l.b16 %v872
        %v921 = vunpack.c.l.b16 %v873
        %v922 = vunpack.c.l.b16 %v874
        %v923 = vpack.c.b16 %v906, %v905
        %v924 = vpack.c.b16 %v908, %v907
        %v925 = vpack.c.b16 %v910, %v909
        %v926 = vpack.c.b16 %v912, %v911
        %v927 = vpack.c.b16 %v914, %v913
        %v928 = vpack.c.b16 %v916, %v915
        %v929 = vpack.c.b16 %v918, %v917
        %v930 = vpack.c.b16 %v920, %v919
        %v931 = vpack.c.b16 %v922, %v921
        %v942 = vsel %vm738, %v885, 0
        %944 = vmatpush.bf16.msra.mxu0 %v930
        %945 = vmatpush.bf16.msra.mxu0 %v929
        %946 = vmatpush.bf16.msra.mxu0 %v928
        %947 = vmatpush.bf16.msra.mxu0 %v927
        %948 = vmatpush.bf16.msra.mxu0 %v926
        %949 = vmatpush.bf16.msra.mxu0 %v925
        %950 = vmatpush.bf16.msra.mxu0 %v924
        %951 = vmatpush.bf16.msra.mxu0 %v923
        %952 = vmatmul.bf16.gmra.mxu0 %v882
        %v953 = vpop.f32.mrf.mxu0
        %v954 = vadd.f32 0.0, %v953
        %v955 = vpop.f32.mrf.mxu0
        %v956 = vadd.f32 0.0, %v955
        %957 = vdwg.mxu0
        %958 = vmatpush.bf16.msra.mxu0 0
        %959 = vmatpush.bf16.msra.mxu0 0
        %960 = vmatpush.bf16.msra.mxu0 0
        %961 = vmatpush.bf16.msra.mxu0 0
        %962 = vmatpush.bf16.msra.mxu0 0
        %963 = vmatpush.bf16.msra.mxu0 0
        %964 = vmatpush.bf16.msra.mxu0 0
        %965 = vmatpush.bf16.msra.mxu0 %v931
        %966 = vmatmul.bf16.gmra.mxu0 %v942
        %v967 = vpop.f32.mrf.mxu0
        %v968 = vadd.f32 %v954, %v967
        %v969 = vpop.f32.mrf.mxu0
        %v970 = vadd.f32 %v956, %v969
        %971 = vdwg.mxu0
        %v972 = vadd.f32 %v851, %v968
        %v973 = vadd.f32 %v853, %v970
        %v974 = vld [vmem:[%s4] sm:$0x1]
        %v976 = vperm.slane %v974, 0
        %v978 = vadd.f32 %v972, %v976
        %v979 = vadd.f32 %v973, %v976
        %v980 = vmax.f32 %v978, 0.0
        %v981 = vmax.f32 %v979, 0.0
        %v982 = vpack.c.bf16 %v980, %v980
        %v983 = vpack.c.bf16 %v981, %v981
        %984 = vst [vmem:[%s277] sm:$0xf] %v982
        %985 = vst [vmem:[%s277 + $0x4] sm:$0xf] %v983
        %s986 = sand.u32 %s141, 1
        %s987 = scalar_lea.sflag [#allocation6], %s986
        %s988 = sand.u32 %s141, 1
        %s989 = smul.addr %s988, 8
        %s990 = scalar_lea.vmem [#allocation10], %s989
        // Predicated region
        $region53: #{tpu_custom_call.1} parent=39 // pred_check
          %p991 = pneg %p151
        $region54: #{tpu_custom_call.1} parent=39 // pred_check_branch
          %993 = sbr.rel (%p991) target = $region56
        $region55: #{tpu_custom_call.1} parent=39 // pred_region
          %995 = vsyncadd %s987, 0
          %s996 = smul.addr %s23, 2
          %s997 = smul.addr %s996, 4
          %s998 = scalar_lea.hbm %s5, %s997
          %s999 = sshll.u32 %s990, 4
          %s1000 = int_to_ptr.vmem [resolvable:$true] %s999
          %s1001 = sshll.u32 %s998, 4
          %s1002 = int_to_ptr.hbm [resolvable:$true] %s1001
          %1007 = dma.vmem_to_hbm [thread:$0]  %s1000, 128, %s1002, %s987, 64, 64, 4
        $region56: #{tpu_custom_call.1} parent=39 // pred_fallthru
          _
      $region40: #{tpu_custom_call.1} parent=5 // pred_fallthru
        _
      %p1008 = scmp.le.s32.totalorder 2, %s18
      // Predicated region
      $region57: #{tpu_custom_call.1} parent=5 // pred_check
        %p1009 = pneg %p1008
      $region58: #{tpu_custom_call.1} parent=5 // pred_check_branch
        %1011 = sbr.rel (%p1009) target = $region60
      $region59: #{tpu_custom_call.1} parent=5 // pred_region
        %s1012 = ssub.s32 %s18, 2
        // Predicated region
        $region61: #{tpu_custom_call.1} parent=59 // pred_check
          %p1013 = pneg %p157
        $region62: #{tpu_custom_call.1} parent=59 // pred_check_branch
          %1015 = sbr.rel (%p1013) target = $region64
        $region63: #{tpu_custom_call.1} parent=59 // pred_region
          %s1016 = sand.u32 %s142, 1
          %s1017 = scalar_lea.sflag [#allocation6], %s1016
          %s1018 = sand.u32 %s142, 1
          %s1019 = smul.addr %s1018, 8
          %s1020 = scalar_lea.vmem [#allocation10], %s1019
          %1022 = dma.done %s1017, 128
        $region64: #{tpu_custom_call.1} parent=59 // pred_fallthru
          _
      $region60: #{tpu_custom_call.1} parent=5 // pred_fallthru
        _
    $region6: #{tpu_custom_call.1} parent=1 // loop_footer
      %s22 = sadd.s32 1, %s18
    $region7: #{tpu_custom_call.1} parent=1 // loop_footer_branch
      %17 = sbr.rel target = $region3
    $region8: #{tpu_custom_call.1} parent=1 // loop_exit
      _
    %1023 = vsyncpa [#allocation5], 1
    %s1024 = scalar_lea.sflag [#allocation5], 1
    %1025 = vsyncpa %s1024, 1
    %1026 = vsyncpa [#allocation8], 1
    %1027 = vsyncpa [#allocation6], 1
    %s1028 = scalar_lea.sflag [#allocation6], 1
    %1029 = vsyncpa %s1028, 1

</llo_original>
